<compile_context>
chip_gen: v7x
topology: tpu7x:2x2x1
jax: 0.10.0
libtpu: 0.0.40
codegen_flags: <defaults>
</compile_context>

<pallas_src>
import functools

import jax
import jax.numpy as jnp
from jax.experimental import pallas as pl
from jax.experimental.pallas import tpu as pltpu


HIDDEN = 256
OUT_PAD = 128            # lane-dense padded width of the scalar head
DEFAULT_TILE_M = 4096    # row-tile cap (multiple of 256)


def _round_up(x, m):
    return ((x + m - 1) // m) * m


def _default_bf16_act():
    """bf16 tanh on chips with bf16 VPU/EUP (v6e / v7x); f32 elsewhere."""
    try:
        kind = jax.devices()[0].device_kind.lower()
    except Exception:
        return False
    return not any(g in kind for g in ("v2", "v3", "v4", "v5"))


def _choose_tile_rows(n, cap):
    """Rows per grid step.

    Large tiles amortize the ~0.35 us/step overhead; >=2 steps when n is big
    enough so v7x's two TensorCores both get work; tile rounded so padding
    waste stays well below ~12.5% of n.
    """
    if n <= 512:
        return _round_up(max(n, 16), 16)
    num_tiles = max(pl.cdiv(n, cap), 2)
    per_tile = pl.cdiv(n, num_tiles)
    tm = _round_up(per_tile, 256)
    if num_tiles * tm - n > max(256, n // 8):
        # Rounding to 256 would pad a large fraction of garbage rows; fall
        # back to 16-row alignment (keeps (sublane, bf16-pack) constraints).
        tm = _round_up(per_tile, 16)
    return tm


def _vmem_limit_bytes(tm):
    """Rough per-core VMEM upper bound for this tile size (with slack)."""
    in_tiles = 2 * 2 * tm * 128 * 4      # x + actions tiles (lane-padded), 2 buffers each
    out_tile = 2 * tm * OUT_PAD * 2      # bf16 output tile, 2 buffers
    weights = 2 << 20                    # resident weights/biases (generous)
    temps = tm * 6144                    # f32/bf16 activation temporaries slack
    est = in_tiles + out_tile + weights + temps
    return int(min(max(est, 24 << 20), 48 << 20))


def _mlp_kernel(xo_ref, xa_ref, w1o_ref, w1a_ref, b1_ref,
                w2_ref, b2_ref, w3_ref, b3_ref, w4_ref, b4_ref, o_ref,
                *, bf16_act):
    # Fused 4-layer MLP (3x tanh hidden layers + linear head) on one row tile.
    # Layer 1 in f32 (tiny K); hidden layers bf16 on the MXU with f32 accum.
    h = jnp.dot(xo_ref[...], w1o_ref[...], preferred_element_type=jnp.float32)
    h = h + jnp.dot(xa_ref[...], w1a_ref[...], preferred_element_type=jnp.float32)
    h = h + b1_ref[...]

    if bf16_act:
        # v6e/v7x: bf16 tanh on the EUP; result feeds the next MXU dot directly.
        h = jnp.tanh(h.astype(jnp.bfloat16))
        h = jnp.tanh((jnp.dot(h, w2_ref[...],
                              preferred_element_type=jnp.float32)
                      + b2_ref[...]).astype(jnp.bfloat16))
        h = jnp.tanh((jnp.dot(h, w3_ref[...],
                              preferred_element_type=jnp.float32)
                      + b3_ref[...]).astype(jnp.bfloat16))
        out = jnp.dot(h, w4_ref[...],
                      preferred_element_type=jnp.float32) + b4_ref[...]
    else:
        # v5e: no bf16 VPU/EUP -> keep tanh/bias in f32, cast only for the MXU.
        h = jnp.tanh(h)
        h = jnp.tanh(jnp.dot(h.astype(jnp.bfloat16), w2_ref[...],
                             preferred_element_type=jnp.float32) + b2_ref[...])
        h = jnp.tanh(jnp.dot(h.astype(jnp.bfloat16), w3_ref[...],
                             preferred_element_type=jnp.float32) + b3_ref[...])
        out = jnp.dot(h.astype(jnp.bfloat16), w4_ref[...],
                      preferred_element_type=jnp.float32) + b4_ref[...]

    o_ref[...] = out.astype(o_ref.dtype)


@functools.partial(jax.jit, static_argnames=("tile_m", "bf16_act"))
def _forward_impl(x, actions, params, tile_m, bf16_act):
    b, s, obs_dim = x.shape
    n = b * s

    # Pure layout work: flatten (no concat -> no extra HBM pass over inputs).
    x_flat = x.reshape(n, obs_dim)
    a_flat = actions.reshape(n, -1)
    act_dim = a_flat.shape[1]

    (w1o, w1a, b1), (w2, b2), (w3, b3), (w4p, b4p) = params

    tm = _choose_tile_rows(n, tile_m)
    n_pad = _round_up(n, tm)
    if n_pad != n:
        pad = n_pad - n
        x_flat = jnp.pad(x_flat, ((0, pad), (0, 0)))
        a_flat = jnp.pad(a_flat, ((0, pad), (0, 0)))

    grid = (n_pad // tm,)
    row_spec = lambda w: pl.BlockSpec((tm, w), lambda i: (i, 0))
    const_spec = lambda shape: pl.BlockSpec(shape, lambda i: (0, 0))

    kernel = functools.partial(_mlp_kernel, bf16_act=bf16_act)

    out_pad = pl.pallas_call(
        kernel,
        out_shape=jax.ShapeDtypeStruct((n_pad, OUT_PAD), jnp.bfloat16),
        grid=grid,
        in_specs=[
            row_spec(obs_dim),                 # x tile
            row_spec(act_dim),                 # action tile
            const_spec((obs_dim, HIDDEN)),     # W1[:obs]   (f32)
            const_spec((act_dim, HIDDEN)),     # W1[obs:]   (f32)
            const_spec((1, HIDDEN)),           # b1
            const_spec((HIDDEN, HIDDEN)),      # W2 (bf16)
            const_spec((1, HIDDEN)),           # b2
            const_spec((HIDDEN, HIDDEN)),      # W3 (bf16)
            const_spec((1, HIDDEN)),           # b3
            const_spec((HIDDEN, OUT_PAD)),     # W4 (bf16, lane-padded)
            const_spec((1, OUT_PAD)),          # b4 (lane-padded)
        ],
        out_specs=row_spec(OUT_PAD),
        compiler_params=pltpu.CompilerParams(
            dimension_semantics=("parallel",),
            vmem_limit_bytes=_vmem_limit_bytes(tm),
        ),
    )(x_flat, a_flat, w1o, w1a, b1, w2, b2, w3, b3, w4p, b4p)

    return out_pad[:n, :1].astype(jnp.float32).reshape(b, s, 1)


def reward_predictor_forward(x, actions, params, tile_m=DEFAULT_TILE_M,
                             bf16_act=None):
    """x: (B, S, obs_dim) f32, actions: (B, S, act_dim) f32 -> (B, S, 1) f32."""
    if bf16_act is None:
        bf16_act = _default_bf16_act()
    return _forward_impl(x, actions, params, tile_m, bool(bf16_act))


def init_params(key, obs_dim, act_dim, hidden=HIDDEN):
    """Deterministic orthogonal init (std=sqrt(2)) + zero bias, as in layer_init.

    Weights stored as (in_features, out_features).  Layer-1 weights stay f32
    (full-precision first layer); hidden/head weights bf16.  The scalar head
    is zero-padded to OUT_PAD lanes for lane-dense stores.
    """
    std = jnp.sqrt(2.0)
    ortho = jax.nn.initializers.orthogonal(scale=std)
    k1, k2, k3, k4 = jax.random.split(key, 4)
    in_dim = obs_dim + act_dim

    w1 = ortho(k1, (in_dim, hidden), jnp.float32)
    w2 = ortho(k2, (hidden, hidden), jnp.float32).astype(jnp.bfloat16)
    w3 = ortho(k3, (hidden, hidden), jnp.float32).astype(jnp.bfloat16)
    w4 = ortho(k4, (hidden, 1), jnp.float32)

    w1o = w1[:obs_dim]
    w1a = w1[obs_dim:]
    w4p = jnp.pad(w4, ((0, 0), (0, OUT_PAD - 1))).astype(jnp.bfloat16)

    b1 = jnp.zeros((1, hidden), jnp.float32)
    b2 = jnp.zeros((1, hidden), jnp.float32)
    b3 = jnp.zeros((1, hidden), jnp.float32)
    b4p = jnp.zeros((1, OUT_PAD), jnp.float32)

    return ((w1o, w1a, b1), (w2, b2), (w3, b3), (w4p, b4p))


def _reference_forward(x, actions, params):
    """f32 reference using the same stored weights."""
    b, s, obs_dim = x.shape
    feat = jnp.concatenate([x, actions], axis=-1).reshape(b * s, -1)
    (w1o, w1a, b1), (w2, b2), (w3, b3), (w4p, b4p) = params
    w1 = jnp.concatenate([w1o, w1a], axis=0).astype(jnp.float32)
    h = jnp.tanh(feat @ w1 + b1)
    h = jnp.tanh(h @ w2.astype(jnp.float32) + b2)
    h = jnp.tanh(h @ w3.astype(jnp.float32) + b3)
    out = h @ w4p[:, :1].astype(jnp.float32) + b4p[:, :1]
    return out.reshape(b, s, 1)


if __name__ == "__main__":
    key = jax.random.PRNGKey(0)
    k_x, k_a, k_p = jax.random.split(key, 3)

    # Small MuJoCo-like shapes: batch=2, sequence=8, obs_dim=11, act_dim=3.
    B, S, OBS_DIM, ACT_DIM = 2, 8, 11, 3
    x = jax.random.normal(k_x, (B, S, OBS_DIM), dtype=jnp.float32)
    actions = jax.random.normal(k_a, (B, S, ACT_DIM), dtype=jnp.float32)

    params = init_params(k_p, OBS_DIM, ACT_DIM)

    out = reward_predictor_forward(x, actions, params)
    out = jax.block_until_ready(out)

    ref = _reference_forward(x, actions, params)
    assert out.shape == (B, S, 1), out.shape
    # bf16 MXU / bf16 head output vs f32 reference -> relaxed tolerance.
    assert jnp.allclose(out, ref, atol=5e-2, rtol=5e-2), "mismatch vs reference"

    print("KERNEL_OK")
</pallas_src>

<mosaic_0001>
module attributes {stable_mosaic.version = 11 : i64} {
  func.func @_mlp_kernel(%arg0: i32, %arg1: memref<16x11xf32, #tpu.memory_space<vmem>>, %arg2: memref<16x3xf32, #tpu.memory_space<vmem>>, %arg3: memref<11x256xf32, #tpu.memory_space<vmem>>, %arg4: memref<3x256xf32, #tpu.memory_space<vmem>>, %arg5: memref<1x256xf32, #tpu.memory_space<vmem>>, %arg6: memref<256x256xbf16, #tpu.memory_space<vmem>>, %arg7: memref<1x256xf32, #tpu.memory_space<vmem>>, %arg8: memref<256x256xbf16, #tpu.memory_space<vmem>>, %arg9: memref<1x256xf32, #tpu.memory_space<vmem>>, %arg10: memref<256x128xbf16, #tpu.memory_space<vmem>>, %arg11: memref<1x128xf32, #tpu.memory_space<vmem>>, %arg12: memref<16x128xbf16, #tpu.memory_space<vmem>>) attributes {dimension_semantics = [#tpu.dimension_semantics<parallel>], iteration_bounds = array<i64: 1>, scalar_prefetch = 0 : i64, scratch_operands = 0 : i64, tpu.core_type = #tpu.core_type<tc>, window_params = [{transform_indices = @transform_0, window_bounds = array<i64: 16, 11>}, {transform_indices = @transform_1, window_bounds = array<i64: 16, 3>}, {pipeline_mode = #tpu.pipeline_mode<synchronous>, transform_indices = @transform_2, window_bounds = array<i64: 11, 256>}, {pipeline_mode = #tpu.pipeline_mode<synchronous>, transform_indices = @transform_3, window_bounds = array<i64: 3, 256>}, {pipeline_mode = #tpu.pipeline_mode<synchronous>, transform_indices = @transform_4, window_bounds = array<i64: 1, 256>}, {pipeline_mode = #tpu.pipeline_mode<synchronous>, transform_indices = @transform_5, window_bounds = array<i64: 256, 256>}, {pipeline_mode = #tpu.pipeline_mode<synchronous>, transform_indices = @transform_6, window_bounds = array<i64: 1, 256>}, {pipeline_mode = #tpu.pipeline_mode<synchronous>, transform_indices = @transform_7, window_bounds = array<i64: 256, 256>}, {pipeline_mode = #tpu.pipeline_mode<synchronous>, transform_indices = @transform_8, window_bounds = array<i64: 1, 256>}, {pipeline_mode = #tpu.pipeline_mode<synchronous>, transform_indices = @transform_9, window_bounds = array<i64: 256, 128>}, {pipeline_mode = #tpu.pipeline_mode<synchronous>, transform_indices = @transform_10, window_bounds = array<i64: 1, 128>}, {transform_indices = @transform_11, window_bounds = array<i64: 16, 128>}]} {
    %c0 = arith.constant 0 : index
    %c0_0 = arith.constant 0 : index
    %0 = vector.load %arg1[%c0, %c0_0] : memref<16x11xf32, #tpu.memory_space<vmem>>, vector<16x11xf32>
    %c0_1 = arith.constant 0 : index
    %c0_2 = arith.constant 0 : index
    %1 = vector.load %arg3[%c0_1, %c0_2] : memref<11x256xf32, #tpu.memory_space<vmem>>, vector<11x256xf32>
    %cst = arith.constant dense<0.000000e+00> : vector<16x256xf32>
    %2 = tpu.matmul %0, %1, %cst {dimension_numbers = #tpu.dot_dimension_numbers<[1], [0], [0], [1], [0, 0, 1, 1], [], []>} : vector<16x11xf32>, vector<11x256xf32>, vector<16x256xf32> -> vector<16x256xf32>
    %c0_3 = arith.constant 0 : index
    %c0_4 = arith.constant 0 : index
    %3 = vector.load %arg2[%c0_3, %c0_4] : memref<16x3xf32, #tpu.memory_space<vmem>>, vector<16x3xf32>
    %c0_5 = arith.constant 0 : index
    %c0_6 = arith.constant 0 : index
    %4 = vector.load %arg4[%c0_5, %c0_6] : memref<3x256xf32, #tpu.memory_space<vmem>>, vector<3x256xf32>
    %cst_7 = arith.constant dense<0.000000e+00> : vector<16x256xf32>
    %5 = tpu.matmul %3, %4, %cst_7 {dimension_numbers = #tpu.dot_dimension_numbers<[1], [0], [0], [1], [0, 0, 1, 1], [], []>} : vector<16x3xf32>, vector<3x256xf32>, vector<16x256xf32> -> vector<16x256xf32>
    %6 = arith.addf %2, %5 : vector<16x256xf32>
    %c0_8 = arith.constant 0 : index
    %c0_9 = arith.constant 0 : index
    %7 = vector.load %arg5[%c0_8, %c0_9] : memref<1x256xf32, #tpu.memory_space<vmem>>, vector<1x256xf32>
    %8 = vector.broadcast %7 : vector<1x256xf32> to vector<16x256xf32>
    %9 = arith.addf %6, %8 : vector<16x256xf32>
    %10 = arith.truncf %9 : vector<16x256xf32> to vector<16x256xbf16>
    %11 = math.tanh %10 : vector<16x256xbf16>
    %c0_10 = arith.constant 0 : index
    %c0_11 = arith.constant 0 : index
    %12 = vector.load %arg6[%c0_10, %c0_11] : memref<256x256xbf16, #tpu.memory_space<vmem>>, vector<256x256xbf16>
    %cst_12 = arith.constant dense<0.000000e+00> : vector<16x256xf32>
    %13 = tpu.matmul %11, %12, %cst_12 {dimension_numbers = #tpu.dot_dimension_numbers<[1], [0], [0], [1], [0, 0, 1, 1], [], []>} : vector<16x256xbf16>, vector<256x256xbf16>, vector<16x256xf32> -> vector<16x256xf32>
    %c0_13 = arith.constant 0 : index
    %c0_14 = arith.constant 0 : index
    %14 = vector.load %arg7[%c0_13, %c0_14] : memref<1x256xf32, #tpu.memory_space<vmem>>, vector<1x256xf32>
    %15 = vector.broadcast %14 : vector<1x256xf32> to vector<16x256xf32>
    %16 = arith.addf %13, %15 : vector<16x256xf32>
    %17 = arith.truncf %16 : vector<16x256xf32> to vector<16x256xbf16>
    %18 = math.tanh %17 : vector<16x256xbf16>
    %c0_15 = arith.constant 0 : index
    %c0_16 = arith.constant 0 : index
    %19 = vector.load %arg8[%c0_15, %c0_16] : memref<256x256xbf16, #tpu.memory_space<vmem>>, vector<256x256xbf16>
    %cst_17 = arith.constant dense<0.000000e+00> : vector<16x256xf32>
    %20 = tpu.matmul %18, %19, %cst_17 {dimension_numbers = #tpu.dot_dimension_numbers<[1], [0], [0], [1], [0, 0, 1, 1], [], []>} : vector<16x256xbf16>, vector<256x256xbf16>, vector<16x256xf32> -> vector<16x256xf32>
    %c0_18 = arith.constant 0 : index
    %c0_19 = arith.constant 0 : index
    %21 = vector.load %arg9[%c0_18, %c0_19] : memref<1x256xf32, #tpu.memory_space<vmem>>, vector<1x256xf32>
    %22 = vector.broadcast %21 : vector<1x256xf32> to vector<16x256xf32>
    %23 = arith.addf %20, %22 : vector<16x256xf32>
    %24 = arith.truncf %23 : vector<16x256xf32> to vector<16x256xbf16>
    %25 = math.tanh %24 : vector<16x256xbf16>
    %c0_20 = arith.constant 0 : index
    %c0_21 = arith.constant 0 : index
    %26 = vector.load %arg10[%c0_20, %c0_21] : memref<256x128xbf16, #tpu.memory_space<vmem>>, vector<256x128xbf16>
    %cst_22 = arith.constant dense<0.000000e+00> : vector<16x128xf32>
    %27 = tpu.matmul %25, %26, %cst_22 {dimension_numbers = #tpu.dot_dimension_numbers<[1], [0], [0], [1], [0, 0, 1, 1], [], []>} : vector<16x256xbf16>, vector<256x128xbf16>, vector<16x128xf32> -> vector<16x128xf32>
    %c0_23 = arith.constant 0 : index
    %c0_24 = arith.constant 0 : index
    %28 = vector.load %arg11[%c0_23, %c0_24] : memref<1x128xf32, #tpu.memory_space<vmem>>, vector<1x128xf32>
    %29 = vector.broadcast %28 : vector<1x128xf32> to vector<16x128xf32>
    %30 = arith.addf %27, %29 : vector<16x128xf32>
    %31 = arith.truncf %30 : vector<16x128xf32> to vector<16x128xbf16>
    %c0_25 = arith.constant 0 : index
    %c0_26 = arith.constant 0 : index
    %32 = vector.load %arg12[%c0_25, %c0_26] : memref<16x128xbf16, #tpu.memory_space<vmem>>, vector<16x128xbf16>
    tpu.vector_store %arg12[%c0_25, %c0_26], %31 {strides = array<i32>} : memref<16x128xbf16, #tpu.memory_space<vmem>>, vector<16x128xbf16>,
    return
  }
  func.func @transform_0(%arg0: i32) -> (i32, i32) {
    %c0_i32 = arith.constant 0 : i32
    %c0_i32_0 = arith.constant 0 : i32
    return %arg0, %c0_i32 : i32, i32
  }
  func.func @transform_1(%arg0: i32) -> (i32, i32) {
    %c0_i32 = arith.constant 0 : i32
    %c0_i32_0 = arith.constant 0 : i32
    return %arg0, %c0_i32 : i32, i32
  }
  func.func @transform_2(%arg0: i32) -> (i32, i32) {
    %c0_i32 = arith.constant 0 : i32
    %c0_i32_0 = arith.constant 0 : i32
    %c0_i32_1 = arith.constant 0 : i32
    return %c0_i32, %c0_i32_0 : i32, i32
  }
  func.func @transform_3(%arg0: i32) -> (i32, i32) {
    %c0_i32 = arith.constant 0 : i32
    %c0_i32_0 = arith.constant 0 : i32
    %c0_i32_1 = arith.constant 0 : i32
    return %c0_i32, %c0_i32_0 : i32, i32
  }
  func.func @transform_4(%arg0: i32) -> (i32, i32) {
    %c0_i32 = arith.constant 0 : i32
    %c0_i32_0 = arith.constant 0 : i32
    %c0_i32_1 = arith.constant 0 : i32
    return %c0_i32, %c0_i32_0 : i32, i32
  }
  func.func @transform_5(%arg0: i32) -> (i32, i32) {
    %c0_i32 = arith.constant 0 : i32
    %c0_i32_0 = arith.constant 0 : i32
    %c0_i32_1 = arith.constant 0 : i32
    return %c0_i32, %c0_i32_0 : i32, i32
  }
  func.func @transform_6(%arg0: i32) -> (i32, i32) {
    %c0_i32 = arith.constant 0 : i32
    %c0_i32_0 = arith.constant 0 : i32
    %c0_i32_1 = arith.constant 0 : i32
    return %c0_i32, %c0_i32_0 : i32, i32
  }
  func.func @transform_7(%arg0: i32) -> (i32, i32) {
    %c0_i32 = arith.constant 0 : i32
    %c0_i32_0 = arith.constant 0 : i32
    %c0_i32_1 = arith.constant 0 : i32
    return %c0_i32, %c0_i32_0 : i32, i32
  }
  func.func @transform_8(%arg0: i32) -> (i32, i32) {
    %c0_i32 = arith.constant 0 : i32
    %c0_i32_0 = arith.constant 0 : i32
    %c0_i32_1 = arith.constant 0 : i32
    return %c0_i32, %c0_i32_0 : i32, i32
  }
  func.func @transform_9(%arg0: i32) -> (i32, i32) {
    %c0_i32 = arith.constant 0 : i32
    %c0_i32_0 = arith.constant 0 : i32
    %c0_i32_1 = arith.constant 0 : i32
    return %c0_i32, %c0_i32_0 : i32, i32
  }
  func.func @transform_10(%arg0: i32) -> (i32, i32) {
    %c0_i32 = arith.constant 0 : i32
    %c0_i32_0 = arith.constant 0 : i32
    %c0_i32_1 = arith.constant 0 : i32
    return %c0_i32, %c0_i32_0 : i32, i32
  }
  func.func @transform_11(%arg0: i32) -> (i32, i32) {
    %c0_i32 = arith.constant 0 : i32
    %c0_i32_0 = arith.constant 0 : i32
    return %arg0, %c0_i32 : i32, i32
  }
}

</mosaic_0001>

<llo_original>
// kernel: _forward_impl.1
$region0: #{_forward_impl.1}
  #allocation0 [shape = 'u32[]', space=smem, size = 0x4, offset = 0x4, fixed_abs, tag = 'smem constant byte address 0x4 - core index']
  #allocation1 [shape = 'u32[144,128]{1,0:T(1,128)}', space=vmem, size = 0x12000, scoped, tag = 'internal scratch']
  %s0 = inlined_call_operand.hbm [shape: f32[16,11], index: 0, kind: input, shape index: {}]
  %s1 = inlined_call_operand.vmem [shape: f32[16,3], index: 1, kind: input, shape index: {}]
  %s2 = inlined_call_operand.vmem [shape: f32[11,256], index: 2, kind: input, shape index: {}]
  %s3 = inlined_call_operand.vmem [shape: f32[3,256], index: 3, kind: input, shape index: {}]
  %s4 = inlined_call_operand.vmem [shape: f32[1,256], index: 4, kind: input, shape index: {}]
  %s5 = inlined_call_operand.hbm [shape: bf16[256,256], index: 5, kind: input, shape index: {}]
  %s6 = inlined_call_operand.vmem [shape: f32[1,256], index: 6, kind: input, shape index: {}]
  %s7 = inlined_call_operand.hbm [shape: bf16[256,256], index: 7, kind: input, shape index: {}]
  %s8 = inlined_call_operand.vmem [shape: f32[1,256], index: 8, kind: input, shape index: {}]
  %s9 = inlined_call_operand.hbm [shape: bf16[256,128], index: 9, kind: input, shape index: {}]
  %s10 = inlined_call_operand.vmem [shape: f32[1,128], index: 10, kind: input, shape index: {}]
  %s11 = inlined_call_operand.vmem [shape: bf16[16,128], index: 11, kind: output, shape index: {}]
  %s12 = sld [smem:[#allocation0]]
  $region70: #{_forward_impl.1} parent=0
    _
  %s14 = ssub.s32 1, %s12
  %s15 = scalar_select 0, %s14, %s12
  $region1: #{_forward_impl.1} parent=0
    #allocation2 [shape = 'u8[8192]{0}', space=vmem, size = 0x2000, scoped, tag = 'input window, operand 0, single buffered']
    #allocation3 [shape = 's32[1]{0}', space=sflag, size = 0x4, scoped, tag = 'scoped memory for _forward_impl.1']
    #allocation4 [shape = 'u8[131072]{0}', space=vmem, size = 0x20000, scoped, tag = 'input window, operand 5, single buffered']
    #allocation5 [shape = 's32[1]{0}', space=sflag, size = 0x4, scoped, tag = 'scoped memory for _forward_impl.1']
    #allocation6 [shape = 'u8[131072]{0}', space=vmem, size = 0x20000, scoped, tag = 'input window, operand 7, single buffered']
    #allocation7 [shape = 'u8[65536]{0}', space=vmem, size = 0x10000, scoped, tag = 'input window, operand 9, single buffered']
    #allocation8 [shape = 's32[1]{0}', space=sflag, size = 0x4, scoped, tag = 'scoped memory for _forward_impl.1']
    %16 = vsyncpa [#allocation3], 0
    %17 = vsyncpa [#allocation5], 0
    %18 = vsyncpa [#allocation8], 0
    // Predicated region
    $region2: #{_forward_impl.1} parent=1 // pred_check
      _
    $region3: #{_forward_impl.1} parent=1 // pred_check_branch
      %20 = sbr.rel (0) target = $region5
    $region4: #{_forward_impl.1} parent=1 // pred_region
      %s22 = ssub.s32 256, 256
      %23 = vsyncadd [#allocation3], %s22
      %s24 = sshll.u32 [#allocation2], 4
      %s25 = int_to_ptr.vmem [resolvable:$true] %s24
      %30 = dma.hbm_to_vmem [thread:$0]  %s0, 256, %s25, [#allocation3], 128, 128, 8
    $region5: #{_forward_impl.1} parent=1 // pred_fallthru
      _
    // Predicated region
    $region6: #{_forward_impl.1} parent=1 // pred_check
      _
    $region7: #{_forward_impl.1} parent=1 // pred_check_branch
      %32 = sbr.rel (0) target = $region9
    $region8: #{_forward_impl.1} parent=1 // pred_region
      _
    $region9: #{_forward_impl.1} parent=1 // pred_fallthru
      _
    // Predicated region
    $region10: #{_forward_impl.1} parent=1 // pred_check
      _
    $region11: #{_forward_impl.1} parent=1 // pred_check_branch
      %34 = sbr.rel (0) target = $region13
    $region12: #{_forward_impl.1} parent=1 // pred_region
      _
    $region13: #{_forward_impl.1} parent=1 // pred_fallthru
      _
    // Predicated region
    $region14: #{_forward_impl.1} parent=1 // pred_check
      _
    $region15: #{_forward_impl.1} parent=1 // pred_check_branch
      %36 = sbr.rel (0) target = $region17
    $region16: #{_forward_impl.1} parent=1 // pred_region
      _
    $region17: #{_forward_impl.1} parent=1 // pred_fallthru
      _
    // Predicated region
    $region18: #{_forward_impl.1} parent=1 // pred_check
      _
    $region19: #{_forward_impl.1} parent=1 // pred_check_branch
      %38 = sbr.rel (0) target = $region21
    $region20: #{_forward_impl.1} parent=1 // pred_region
      _
    $region21: #{_forward_impl.1} parent=1 // pred_fallthru
      _
    // Predicated region
    $region22: #{_forward_impl.1} parent=1 // pred_check
      _
    $region23: #{_forward_impl.1} parent=1 // pred_check_branch
      %40 = sbr.rel (0) target = $region25
    $region24: #{_forward_impl.1} parent=1 // pred_region
      %s42 = ssub.s32 4096, 4096
      %43 = vsyncadd [#allocation5], %s42
      %s44 = sshll.u32 [#allocation4], 4
      %s45 = int_to_ptr.vmem [resolvable:$true] %s44
      %50 = dma.hbm_to_vmem [thread:$0]  %s5, 4096, %s45, [#allocation5], 128, 128, 8
    $region25: #{_forward_impl.1} parent=1 // pred_fallthru
      _
    // Predicated region
    $region26: #{_forward_impl.1} parent=1 // pred_check
      _
    $region27: #{_forward_impl.1} parent=1 // pred_check_branch
      %52 = sbr.rel (0) target = $region29
    $region28: #{_forward_impl.1} parent=1 // pred_region
      _
    $region29: #{_forward_impl.1} parent=1 // pred_fallthru
      _
    // Predicated region
    $region30: #{_forward_impl.1} parent=1 // pred_check
      _
    $region31: #{_forward_impl.1} parent=1 // pred_check_branch
      %54 = sbr.rel (0) target = $region33
    $region32: #{_forward_impl.1} parent=1 // pred_region
      %s56 = ssub.s32 4096, 4096
      %57 = vsyncadd [#allocation5], %s56
      %s58 = sshll.u32 [#allocation6], 4
      %s59 = int_to_ptr.vmem [resolvable:$true] %s58
      %64 = dma.hbm_to_vmem [thread:$0]  %s7, 4096, %s59, [#allocation5], 128, 128, 8
    $region33: #{_forward_impl.1} parent=1 // pred_fallthru
      _
    // Predicated region
    $region34: #{_forward_impl.1} parent=1 // pred_check
      _
    $region35: #{_forward_impl.1} parent=1 // pred_check_branch
      %66 = sbr.rel (0) target = $region37
    $region36: #{_forward_impl.1} parent=1 // pred_region
      _
    $region37: #{_forward_impl.1} parent=1 // pred_fallthru
      _
    // Predicated region
    $region38: #{_forward_impl.1} parent=1 // pred_check
      _
    $region39: #{_forward_impl.1} parent=1 // pred_check_branch
      %68 = sbr.rel (0) target = $region41
    $region40: #{_forward_impl.1} parent=1 // pred_region
      %s70 = ssub.s32 2048, 2048
      %71 = vsyncadd [#allocation8], %s70
      %s72 = sshll.u32 [#allocation7], 4
      %s73 = int_to_ptr.vmem [resolvable:$true] %s72
      %78 = dma.hbm_to_vmem [thread:$0]  %s9, 2048, %s73, [#allocation8], 64, 64, 4
    $region41: #{_forward_impl.1} parent=1 // pred_fallthru
      _
    // Predicated region
    $region42: #{_forward_impl.1} parent=1 // pred_check
      _
    $region43: #{_forward_impl.1} parent=1 // pred_check_branch
      %80 = sbr.rel (0) target = $region45
    $region44: #{_forward_impl.1} parent=1 // pred_region
      _
    $region45: #{_forward_impl.1} parent=1 // pred_fallthru
      _
    // Predicated region
    $region46: #{_forward_impl.1} parent=1 // pred_check
      _
    $region47: #{_forward_impl.1} parent=1 // pred_check_branch
      %82 = sbr.rel (0) target = $region49
    $region48: #{_forward_impl.1} parent=1 // pred_region
      %83 = dma.done [#allocation3], 256
    $region49: #{_forward_impl.1} parent=1 // pred_fallthru
      _
    // Predicated region
    $region50: #{_forward_impl.1} parent=1 // pred_check
      _
    $region51: #{_forward_impl.1} parent=1 // pred_check_branch
      %85 = sbr.rel (0) target = $region53
    $region52: #{_forward_impl.1} parent=1 // pred_region
      %86 = dma.done [#allocation5], 4096
    $region53: #{_forward_impl.1} parent=1 // pred_fallthru
      _
    // Predicated region
    $region54: #{_forward_impl.1} parent=1 // pred_check
      _
    $region55: #{_forward_impl.1} parent=1 // pred_check_branch
      %88 = sbr.rel (0) target = $region57
    $region56: #{_forward_impl.1} parent=1 // pred_region
      %89 = dma.done [#allocation5], 4096
    $region57: #{_forward_impl.1} parent=1 // pred_fallthru
      _
    // Predicated region
    $region58: #{_forward_impl.1} parent=1 // pred_check
      _
    $region59: #{_forward_impl.1} parent=1 // pred_check_branch
      %91 = sbr.rel (0) target = $region61
    $region60: #{_forward_impl.1} parent=1 // pred_region
      %92 = dma.done [#allocation8], 2048
    $region61: #{_forward_impl.1} parent=1 // pred_fallthru
      _
    %v94 = vld [vmem:[#allocation2] sm:$0xff]
    %v95 = vld [vmem:[#allocation2 + $0x8] sm:$0xff]
    %v96 = vld [vmem:[%s2] sm:$0xff]
    %v97 = vld [vmem:[%s2 + $0x8] sm:$0xff]
    %v98 = vld [vmem:[%s2 + $0x10] sm:$0x7]
    %v99 = vld [vmem:[%s2 + $0x18] sm:$0x7]
    %v100 = vld [vmem:[%s1] sm:$0xff]
    %v101 = vld [vmem:[%s1 + $0x8] sm:$0xff]
    %v102 = vld [vmem:[%s3] sm:$0x77]
    %v104 = vcombine.high %v102, %v102
    %vm105 = vcmask 23552
    %v107 = vsel %vm105, %v100, 0
    %v110 = vsel %vm105, %v101, 0
    %vm112 = vcmask 1042432
    %v113 = vsel %vm112, %v102, 0
    %v115 = vsel %vm112, %v104, 0
    %117 = vmatprep.subr.mxu0 %v115
    %118 = vmatpush1.msra.mxu0 %v113
    %119 = vmatprep.subr.mxu0 0.0
    %120 = vmatpush1.msra.mxu0 0.0
    %121 = vmatprep.subr.mxu0 0.0
    %122 = vmatpush1.msra.mxu0 0.0
    %123 = vmatprep.subr.mxu0 0.0
    %124 = vmatpush1.msra.mxu0 0.0
    %125 = vmatprep.subr.mxu0 0.0
    %126 = vmatpush1.msra.mxu0 0.0
    %127 = vmatprep.subr.mxu0 0.0
    %128 = vmatpush1.msra.mxu0 0.0
    %129 = vmatprep.subr.mxu0 0.0
    %130 = vmatpush1.msra.mxu0 0.0
    %131 = vmatprep.subr.mxu0 0.0
    %132 = vmatpush1.msra.mxu0 0.0
    %133 = vmatprep.subr.mxu0 0.0
    %134 = vmatpush1.msra.mxu0 0.0
    %135 = vmatprep.subr.mxu0 0.0
    %136 = vmatpush1.msra.mxu0 0.0
    %137 = vmatprep.subr.mxu0 0.0
    %138 = vmatpush1.msra.mxu0 0.0
    %139 = vmatprep.subr.mxu0 0.0
    %140 = vmatpush1.msra.mxu0 0.0
    %141 = vmatprep.subr.mxu0 0.0
    %142 = vmatpush1.msra.mxu0 0.0
    %143 = vmatprep.subr.mxu0 0.0
    %144 = vmatpush1.msra.mxu0 0.0
    %145 = vmatprep.subr.mxu0 0.0
    %146 = vmatpush1.msra.mxu0 0.0
    %147 = vmatprep.subr.mxu0 0.0
    %148 = vmatpush1.msra.mxu0 0.0
    %149 = vmatprep.subr.mxu0 0.0
    %150 = vmatpush1.msra.mxu0 0.0
    %151 = vmatprep.subr.mxu0 0.0
    %152 = vmatpush1.msra.mxu0 0.0
    %153 = vmatprep.subr.mxu0 0.0
    %154 = vmatpush1.msra.mxu0 0.0
    %155 = vmatprep.subr.mxu0 0.0
    %156 = vmatpush1.msra.mxu0 0.0
    %157 = vmatprep.subr.mxu0 0.0
    %158 = vmatpush1.msra.mxu0 0.0
    %159 = vmatprep.subr.mxu0 0.0
    %160 = vmatpush1.msra.mxu0 0.0
    %161 = vmatprep.subr.mxu0 0.0
    %162 = vmatpush1.msra.mxu0 0.0
    %163 = vmatprep.subr.mxu0 0.0
    %164 = vmatpush1.msra.mxu0 0.0
    %165 = vmatprep.subr.mxu0 0.0
    %166 = vmatpush1.msra.mxu0 0.0
    %167 = vmatprep.subr.mxu0 0.0
    %168 = vmatpush1.msra.mxu0 0.0
    %169 = vmatprep.subr.mxu0 0.0
    %170 = vmatpush1.msra.mxu0 0.0
    %171 = vmatprep.subr.mxu0 0.0
    %172 = vmatpush1.msra.mxu0 0.0
    %173 = vmatprep.subr.mxu0 0.0
    %174 = vmatpush1.msra.mxu0 0.0
    %175 = vmatprep.subr.mxu0 0.0
    %176 = vmatpush1.msra.mxu0 0.0
    %177 = vmatprep.subr.mxu0 0.0
    %178 = vmatpush1.msra.mxu0 0.0
    %179 = vmatprep.subr.mxu0 0.0
    %180 = vmatpush1.msra.mxu0 0.0
    %181 = vmatprep.mubr.f32.mxu0 0.0
    %182 = vmatmul.mubr.f32.gmra.mrb[0].mxu0 %v107
    %v183 = vpop.f32.mrb[0].mxu0
    %v184 = vadd.f32 0.0, %v183
    %v185 = vpop.f32.mrb[0].mxu0
    %v186 = vadd.f32 0.0, %v185
    %187 = vmatprep.mubr.f32.mxu0 0.0
    %188 = vmatmul.mubr.f32.gmra.mrb[0].mxu0 %v110
    %v189 = vpop.f32.mrb[0].mxu0
    %v190 = vadd.f32 0.0, %v189
    %v191 = vpop.f32.mrb[0].mxu0
    %v192 = vadd.f32 0.0, %v191
    %193 = vdwg.mxu0
    %vm194 = vcmask 89088
    %v196 = vsel %vm194, %v94, 0
    %v199 = vsel %vm194, %v95, 0
    %v202 = vsel %vm112, %v98, 0
    %v205 = vsel %vm112, %v99, 0
    %207 = vmatprep.subr.mxu0 %v97
    %208 = vmatpush1.msra.mxu0 %v96
    %209 = vmatprep.subr.mxu0 %v205
    %210 = vmatpush1.msra.mxu0 %v202
    %211 = vmatprep.subr.mxu0 0.0
    %212 = vmatpush1.msra.mxu0 0.0
    %213 = vmatprep.subr.mxu0 0.0
    %214 = vmatpush1.msra.mxu0 0.0
    %215 = vmatprep.subr.mxu0 0.0
    %216 = vmatpush1.msra.mxu0 0.0
    %217 = vmatprep.subr.mxu0 0.0
    %218 = vmatpush1.msra.mxu0 0.0
    %219 = vmatprep.subr.mxu0 0.0
    %220 = vmatpush1.msra.mxu0 0.0
    %221 = vmatprep.subr.mxu0 0.0
    %222 = vmatpush1.msra.mxu0 0.0
    %223 = vmatprep.subr.mxu0 0.0
    %224 = vmatpush1.msra.mxu0 0.0
    %225 = vmatprep.subr.mxu0 0.0
    %226 = vmatpush1.msra.mxu0 0.0
    %227 = vmatprep.subr.mxu0 0.0
    %228 = vmatpush1.msra.mxu0 0.0
    %229 = vmatprep.subr.mxu0 0.0
    %230 = vmatpush1.msra.mxu0 0.0
    %231 = vmatprep.subr.mxu0 0.0
    %232 = vmatpush1.msra.mxu0 0.0
    %233 = vmatprep.subr.mxu0 0.0
    %234 = vmatpush1.msra.mxu0 0.0
    %235 = vmatprep.subr.mxu0 0.0
    %236 = vmatpush1.msra.mxu0 0.0
    %237 = vmatprep.subr.mxu0 0.0
    %238 = vmatpush1.msra.mxu0 0.0
    %239 = vmatprep.subr.mxu0 0.0
    %240 = vmatpush1.msra.mxu0 0.0
    %241 = vmatprep.subr.mxu0 0.0
    %242 = vmatpush1.msra.mxu0 0.0
    %243 = vmatprep.subr.mxu0 0.0
    %244 = vmatpush1.msra.mxu0 0.0
    %245 = vmatprep.subr.mxu0 0.0
    %246 = vmatpush1.msra.mxu0 0.0
    %247 = vmatprep.subr.mxu0 0.0
    %248 = vmatpush1.msra.mxu0 0.0
    %249 = vmatprep.subr.mxu0 0.0
    %250 = vmatpush1.msra.mxu0 0.0
    %251 = vmatprep.subr.mxu0 0.0
    %252 = vmatpush1.msra.mxu0 0.0
    %253 = vmatprep.subr.mxu0 0.0
    %254 = vmatpush1.msra.mxu0 0.0
    %255 = vmatprep.subr.mxu0 0.0
    %256 = vmatpush1.msra.mxu0 0.0
    %257 = vmatprep.subr.mxu0 0.0
    %258 = vmatpush1.msra.mxu0 0.0
    %259 = vmatprep.subr.mxu0 0.0
    %260 = vmatpush1.msra.mxu0 0.0
    %261 = vmatprep.subr.mxu0 0.0
    %262 = vmatpush1.msra.mxu0 0.0
    %263 = vmatprep.subr.mxu0 0.0
    %264 = vmatpush1.msra.mxu0 0.0
    %265 = vmatprep.subr.mxu0 0.0
    %266 = vmatpush1.msra.mxu0 0.0
    %267 = vmatprep.subr.mxu0 0.0
    %268 = vmatpush1.msra.mxu0 0.0
    %269 = vmatprep.subr.mxu0 0.0
    %270 = vmatpush1.msra.mxu0 0.0
    %271 = vmatprep.mubr.f32.mxu0 0.0
    %272 = vmatmul.mubr.f32.gmra.mrb[0].mxu0 %v196
    %v273 = vpop.f32.mrb[0].mxu0
    %v274 = vadd.f32 %v184, %v273
    %v275 = vpop.f32.mrb[0].mxu0
    %v276 = vadd.f32 %v186, %v275
    %277 = vmatprep.mubr.f32.mxu0 0.0
    %278 = vmatmul.mubr.f32.gmra.mrb[0].mxu0 %v199
    %v279 = vpop.f32.mrb[0].mxu0
    %v280 = vadd.f32 %v190, %v279
    %v281 = vpop.f32.mrb[0].mxu0
    %v282 = vadd.f32 %v192, %v281
    %283 = vdwg.mxu0
    %v284 = vld [vmem:[%s4] sm:$0x3]
    %v286 = vlaneseq
    %v287 = vshrl.u32 %v286, 7
    %v288 = vsub.s32 0, %v287
    %v289 = vrot.slane %v284, %v288
    %v290 = vlaneseq
    %v291 = vshrl.u32 %v290, 7
    %v292 = vsub.s32 1, %v291
    %v293 = vrot.slane %v284, %v292
    %v296 = vadd.f32 %v274, %v289
    %v297 = vadd.f32 %v276, %v293
    %v298 = vadd.f32 %v280, %v289
    %v299 = vadd.f32 %v282, %v293
    %v300 = vpack.c.bf16 %v298, %v296
    %v301 = vpack.c.bf16 %v299, %v297
    %v302 = vtanh.bf16.pop %v300
    %v303 = vtanh.bf16.pop %v301
    %v304 = vld [vmem:[#allocation4] sm:$0xff]
    %v305 = vld [vmem:[#allocation4 + $0x8] sm:$0xff]
    %v306 = vld [vmem:[#allocation4 + $0x10] sm:$0xff]
    %v307 = vld [vmem:[#allocation4 + $0x18] sm:$0xff]
    %v308 = vld [vmem:[#allocation4 + $0x20] sm:$0xff]
    %v309 = vld [vmem:[#allocation4 + $0x28] sm:$0xff]
    %v310 = vld [vmem:[#allocation4 + $0x30] sm:$0xff]
    %v311 = vld [vmem:[#allocation4 + $0x38] sm:$0xff]
    %v312 = vld [vmem:[#allocation4 + $0x40] sm:$0xff]
    %v313 = vld [vmem:[#allocation4 + $0x48] sm:$0xff]
    %v314 = vld [vmem:[#allocation4 + $0x50] sm:$0xff]
    %v315 = vld [vmem:[#allocation4 + $0x58] sm:$0xff]
    %v316 = vld [vmem:[#allocation4 + $0x60] sm:$0xff]
    %v317 = vld [vmem:[#allocation4 + $0x68] sm:$0xff]
    %v318 = vld [vmem:[#allocation4 + $0x70] sm:$0xff]
    %v319 = vld [vmem:[#allocation4 + $0x78] sm:$0xff]
    %v320 = vld [vmem:[#allocation4 + $0x80] sm:$0xff]
    %v321 = vld [vmem:[#allocation4 + $0x88] sm:$0xff]
    %v322 = vld [vmem:[#allocation4 + $0x90] sm:$0xff]
    %v323 = vld [vmem:[#allocation4 + $0x98] sm:$0xff]
    %v324 = vld [vmem:[#allocation4 + $0xa0] sm:$0xff]
    %v325 = vld [vmem:[#allocation4 + $0xa8] sm:$0xff]
    %v326 = vld [vmem:[#allocation4 + $0xb0] sm:$0xff]
    %v327 = vld [vmem:[#allocation4 + $0xb8] sm:$0xff]
    %v328 = vld [vmem:[#allocation4 + $0xc0] sm:$0xff]
    %v329 = vld [vmem:[#allocation4 + $0xc8] sm:$0xff]
    %v330 = vld [vmem:[#allocation4 + $0xd0] sm:$0xff]
    %v331 = vld [vmem:[#allocation4 + $0xd8] sm:$0xff]
    %v332 = vld [vmem:[#allocation4 + $0xe0] sm:$0xff]
    %v333 = vld [vmem:[#allocation4 + $0xe8] sm:$0xff]
    %v334 = vld [vmem:[#allocation4 + $0xf0] sm:$0xff]
    %v335 = vld [vmem:[#allocation4 + $0xf8] sm:$0xff]
    %v336 = vld [vmem:[%s6] sm:$0x3]
    %v338 = vlaneseq
    %v339 = vshrl.u32 %v338, 7
    %v340 = vsub.s32 0, %v339
    %v341 = vrot.slane %v336, %v340
    %v342 = vlaneseq
    %v343 = vshrl.u32 %v342, 7
    %v344 = vsub.s32 1, %v343
    %v345 = vrot.slane %v336, %v344
    %v380 = vunpack.c.l.b16 %v304
    %v381 = vunpack.c.h.b16 %v304
    %v382 = vunpack.c.l.b16 %v305
    %v383 = vunpack.c.h.b16 %v305
    %v384 = vunpack.c.l.b16 %v306
    %v385 = vunpack.c.h.b16 %v306
    %v386 = vunpack.c.l.b16 %v307
    %v387 = vunpack.c.h.b16 %v307
    %v388 = vunpack.c.l.b16 %v308
    %v389 = vunpack.c.h.b16 %v308
    %v390 = vunpack.c.l.b16 %v309
    %v391 = vunpack.c.h.b16 %v309
    %v392 = vunpack.c.l.b16 %v310
    %v393 = vunpack.c.h.b16 %v310
    %v394 = vunpack.c.l.b16 %v311
    %v395 = vunpack.c.h.b16 %v311
    %v396 = vunpack.c.l.b16 %v312
    %v397 = vunpack.c.h.b16 %v312
    %v398 = vunpack.c.l.b16 %v313
    %v399 = vunpack.c.h.b16 %v313
    %v400 = vunpack.c.l.b16 %v314
    %v401 = vunpack.c.h.b16 %v314
    %v402 = vunpack.c.l.b16 %v315
    %v403 = vunpack.c.h.b16 %v315
    %v404 = vunpack.c.l.b16 %v316
    %v405 = vunpack.c.h.b16 %v316
    %v406 = vunpack.c.l.b16 %v317
    %v407 = vunpack.c.h.b16 %v317
    %v408 = vunpack.c.l.b16 %v318
    %v409 = vunpack.c.h.b16 %v318
    %v410 = vunpack.c.l.b16 %v319
    %v411 = vunpack.c.h.b16 %v319
    %v412 = vunpack.c.l.b16 %v320
    %v413 = vunpack.c.h.b16 %v320
    %v414 = vunpack.c.l.b16 %v321
    %v415 = vunpack.c.h.b16 %v321
    %v416 = vunpack.c.l.b16 %v322
    %v417 = vunpack.c.h.b16 %v322
    %v418 = vunpack.c.l.b16 %v323
    %v419 = vunpack.c.h.b16 %v323
    %v420 = vunpack.c.l.b16 %v324
    %v421 = vunpack.c.h.b16 %v324
    %v422 = vunpack.c.l.b16 %v325
    %v423 = vunpack.c.h.b16 %v325
    %v424 = vunpack.c.l.b16 %v326
    %v425 = vunpack.c.h.b16 %v326
    %v426 = vunpack.c.l.b16 %v327
    %v427 = vunpack.c.h.b16 %v327
    %v428 = vunpack.c.l.b16 %v328
    %v429 = vunpack.c.h.b16 %v328
    %v430 = vunpack.c.l.b16 %v329
    %v431 = vunpack.c.h.b16 %v329
    %v432 = vunpack.c.l.b16 %v330
    %v433 = vunpack.c.h.b16 %v330
    %v434 = vunpack.c.l.b16 %v331
    %v435 = vunpack.c.h.b16 %v331
    %v436 = vunpack.c.l.b16 %v332
    %v437 = vunpack.c.h.b16 %v332
    %v438 = vunpack.c.l.b16 %v333
    %v439 = vunpack.c.h.b16 %v333
    %v440 = vunpack.c.l.b16 %v334
    %v441 = vunpack.c.h.b16 %v334
    %v442 = vunpack.c.l.b16 %v335
    %v443 = vunpack.c.h.b16 %v335
    %v444 = vpack.c.b16 %v382, %v380
    %v445 = vpack.c.b16 %v383, %v381
    %v446 = vpack.c.b16 %v386, %v384
    %v447 = vpack.c.b16 %v387, %v385
    %v448 = vpack.c.b16 %v390, %v388
    %v449 = vpack.c.b16 %v391, %v389
    %v450 = vpack.c.b16 %v394, %v392
    %v451 = vpack.c.b16 %v395, %v393
    %v452 = vpack.c.b16 %v398, %v396
    %v453 = vpack.c.b16 %v399, %v397
    %v454 = vpack.c.b16 %v402, %v400
    %v455 = vpack.c.b16 %v403, %v401
    %v456 = vpack.c.b16 %v406, %v404
    %v457 = vpack.c.b16 %v407, %v405
    %v458 = vpack.c.b16 %v410, %v408
    %v459 = vpack.c.b16 %v411, %v409
    %v460 = vpack.c.b16 %v414, %v412
    %v461 = vpack.c.b16 %v415, %v413
    %v462 = vpack.c.b16 %v418, %v416
    %v463 = vpack.c.b16 %v419, %v417
    %v464 = vpack.c.b16 %v422, %v420
    %v465 = vpack.c.b16 %v423, %v421
    %v466 = vpack.c.b16 %v426, %v424
    %v467 = vpack.c.b16 %v427, %v425
    %v468 = vpack.c.b16 %v430, %v428
    %v469 = vpack.c.b16 %v431, %v429
    %v470 = vpack.c.b16 %v434, %v432
    %v471 = vpack.c.b16 %v435, %v433
    %v472 = vpack.c.b16 %v438, %v436
    %v473 = vpack.c.b16 %v439, %v437
    %v474 = vpack.c.b16 %v442, %v440
    %v475 = vpack.c.b16 %v443, %v441
    %508 = vmatprep.subr.bf16.mxu0 %v445
    %509 = vmatpush1.bf16.msra.mxu0 %v444
    %510 = vmatprep.subr.bf16.mxu0 %v447
    %511 = vmatpush1.bf16.msra.mxu0 %v446
    %512 = vmatprep.subr.bf16.mxu0 %v449
    %513 = vmatpush1.bf16.msra.mxu0 %v448
    %514 = vmatprep.subr.bf16.mxu0 %v451
    %515 = vmatpush1.bf16.msra.mxu0 %v450
    %516 = vmatprep.subr.bf16.mxu0 %v453
    %517 = vmatpush1.bf16.msra.mxu0 %v452
    %518 = vmatprep.subr.bf16.mxu0 %v455
    %519 = vmatpush1.bf16.msra.mxu0 %v454
    %520 = vmatprep.subr.bf16.mxu0 %v457
    %521 = vmatpush1.bf16.msra.mxu0 %v456
    %522 = vmatprep.subr.bf16.mxu0 %v459
    %523 = vmatpush1.bf16.msra.mxu0 %v458
    %524 = vmatprep.subr.bf16.mxu0 %v461
    %525 = vmatpush1.bf16.msra.mxu0 %v460
    %526 = vmatprep.subr.bf16.mxu0 %v463
    %527 = vmatpush1.bf16.msra.mxu0 %v462
    %528 = vmatprep.subr.bf16.mxu0 %v465
    %529 = vmatpush1.bf16.msra.mxu0 %v464
    %530 = vmatprep.subr.bf16.mxu0 %v467
    %531 = vmatpush1.bf16.msra.mxu0 %v466
    %532 = vmatprep.subr.bf16.mxu0 %v469
    %533 = vmatpush1.bf16.msra.mxu0 %v468
    %534 = vmatprep.subr.bf16.mxu0 %v471
    %535 = vmatpush1.bf16.msra.mxu0 %v470
    %536 = vmatprep.subr.bf16.mxu0 %v473
    %537 = vmatpush1.bf16.msra.mxu0 %v472
    %538 = vmatprep.subr.bf16.mxu0 %v475
    %539 = vmatpush1.bf16.msra.mxu0 %v474
    %540 = vmatprep.mubr.bf16.mxu0 %v303
    %541 = vmatmul.mubr.bf16.gmra.mrb[0].mxu0 %v302
    %v542 = vpop.f32.mrb[0].mxu0
    %v543 = vadd.f32 %v341, %v542
    %v544 = vpop.f32.mrb[0].mxu0
    %v545 = vadd.f32 %v345, %v544
    %v546 = vpop.f32.mrb[0].mxu0
    %v547 = vadd.f32 %v341, %v546
    %v548 = vpop.f32.mrb[0].mxu0
    %v549 = vadd.f32 %v345, %v548
    %550 = vdwg.mxu0
    %v551 = vpack.c.bf16 %v547, %v543
    %v552 = vpack.c.bf16 %v549, %v545
    %v553 = vtanh.bf16.pop %v551
    %v554 = vtanh.bf16.pop %v552
    %v555 = vld [vmem:[#allocation6] sm:$0xff]
    %v556 = vld [vmem:[#allocation6 + $0x8] sm:$0xff]
    %v557 = vld [vmem:[#allocation6 + $0x10] sm:$0xff]
    %v558 = vld [vmem:[#allocation6 + $0x18] sm:$0xff]
    %v559 = vld [vmem:[#allocation6 + $0x20] sm:$0xff]
    %v560 = vld [vmem:[#allocation6 + $0x28] sm:$0xff]
    %v561 = vld [vmem:[#allocation6 + $0x30] sm:$0xff]
    %v562 = vld [vmem:[#allocation6 + $0x38] sm:$0xff]
    %v563 = vld [vmem:[#allocation6 + $0x40] sm:$0xff]
    %v564 = vld [vmem:[#allocation6 + $0x48] sm:$0xff]
    %v565 = vld [vmem:[#allocation6 + $0x50] sm:$0xff]
    %v566 = vld [vmem:[#allocation6 + $0x58] sm:$0xff]
    %v567 = vld [vmem:[#allocation6 + $0x60] sm:$0xff]
    %v568 = vld [vmem:[#allocation6 + $0x68] sm:$0xff]
    %v569 = vld [vmem:[#allocation6 + $0x70] sm:$0xff]
    %v570 = vld [vmem:[#allocation6 + $0x78] sm:$0xff]
    %v571 = vld [vmem:[#allocation6 + $0x80] sm:$0xff]
    %v572 = vld [vmem:[#allocation6 + $0x88] sm:$0xff]
    %v573 = vld [vmem:[#allocation6 + $0x90] sm:$0xff]
    %v574 = vld [vmem:[#allocation6 + $0x98] sm:$0xff]
    %v575 = vld [vmem:[#allocation6 + $0xa0] sm:$0xff]
    %v576 = vld [vmem:[#allocation6 + $0xa8] sm:$0xff]
    %v577 = vld [vmem:[#allocation6 + $0xb0] sm:$0xff]
    %v578 = vld [vmem:[#allocation6 + $0xb8] sm:$0xff]
    %v579 = vld [vmem:[#allocation6 + $0xc0] sm:$0xff]
    %v580 = vld [vmem:[#allocation6 + $0xc8] sm:$0xff]
    %v581 = vld [vmem:[#allocation6 + $0xd0] sm:$0xff]
    %v582 = vld [vmem:[#allocation6 + $0xd8] sm:$0xff]
    %v583 = vld [vmem:[#allocation6 + $0xe0] sm:$0xff]
    %v584 = vld [vmem:[#allocation6 + $0xe8] sm:$0xff]
    %v585 = vld [vmem:[#allocation6 + $0xf0] sm:$0xff]
    %v586 = vld [vmem:[#allocation6 + $0xf8] sm:$0xff]
    %v587 = vld [vmem:[%s8] sm:$0x3]
    %v589 = vlaneseq
    %v590 = vshrl.u32 %v589, 7
    %v591 = vsub.s32 0, %v590
    %v592 = vrot.slane %v587, %v591
    %v593 = vlaneseq
    %v594 = vshrl.u32 %v593, 7
    %v595 = vsub.s32 1, %v594
    %v596 = vrot.slane %v587, %v595
    %v631 = vunpack.c.l.b16 %v555
    %v632 = vunpack.c.h.b16 %v555
    %v633 = vunpack.c.l.b16 %v556
    %v634 = vunpack.c.h.b16 %v556
    %v635 = vunpack.c.l.b16 %v557
    %v636 = vunpack.c.h.b16 %v557
    %v637 = vunpack.c.l.b16 %v558
    %v638 = vunpack.c.h.b16 %v558
    %v639 = vunpack.c.l.b16 %v559
    %v640 = vunpack.c.h.b16 %v559
    %v641 = vunpack.c.l.b16 %v560
    %v642 = vunpack.c.h.b16 %v560
    %v643 = vunpack.c.l.b16 %v561
    %v644 = vunpack.c.h.b16 %v561
    %v645 = vunpack.c.l.b16 %v562
    %v646 = vunpack.c.h.b16 %v562
    %v647 = vunpack.c.l.b16 %v563
    %v648 = vunpack.c.h.b16 %v563
    %v649 = vunpack.c.l.b16 %v564
    %v650 = vunpack.c.h.b16 %v564
    %v651 = vunpack.c.l.b16 %v565
    %v652 = vunpack.c.h.b16 %v565
    %v653 = vunpack.c.l.b16 %v566
    %v654 = vunpack.c.h.b16 %v566
    %v655 = vunpack.c.l.b16 %v567
    %v656 = vunpack.c.h.b16 %v567
    %v657 = vunpack.c.l.b16 %v568
    %v658 = vunpack.c.h.b16 %v568
    %v659 = vunpack.c.l.b16 %v569
    %v660 = vunpack.c.h.b16 %v569
    %v661 = vunpack.c.l.b16 %v570
    %v662 = vunpack.c.h.b16 %v570
    %v663 = vunpack.c.l.b16 %v571
    %v664 = vunpack.c.h.b16 %v571
    %v665 = vunpack.c.l.b16 %v572
    %v666 = vunpack.c.h.b16 %v572
    %v667 = vunpack.c.l.b16 %v573
    %v668 = vunpack.c.h.b16 %v573
    %v669 = vunpack.c.l.b16 %v574
    %v670 = vunpack.c.h.b16 %v574
    %v671 = vunpack.c.l.b16 %v575
    %v672 = vunpack.c.h.b16 %v575
    %v673 = vunpack.c.l.b16 %v576
    %v674 = vunpack.c.h.b16 %v576
    %v675 = vunpack.c.l.b16 %v577
    %v676 = vunpack.c.h.b16 %v577
    %v677 = vunpack.c.l.b16 %v578
    %v678 = vunpack.c.h.b16 %v578
    %v679 = vunpack.c.l.b16 %v579
    %v680 = vunpack.c.h.b16 %v579
    %v681 = vunpack.c.l.b16 %v580
    %v682 = vunpack.c.h.b16 %v580
    %v683 = vunpack.c.l.b16 %v581
    %v684 = vunpack.c.h.b16 %v581
    %v685 = vunpack.c.l.b16 %v582
    %v686 = vunpack.c.h.b16 %v582
    %v687 = vunpack.c.l.b16 %v583
    %v688 = vunpack.c.h.b16 %v583
    %v689 = vunpack.c.l.b16 %v584
    %v690 = vunpack.c.h.b16 %v584
    %v691 = vunpack.c.l.b16 %v585
    %v692 = vunpack.c.h.b16 %v585
    %v693 = vunpack.c.l.b16 %v586
    %v694 = vunpack.c.h.b16 %v586
    %v695 = vpack.c.b16 %v633, %v631
    %v696 = vpack.c.b16 %v634, %v632
    %v697 = vpack.c.b16 %v637, %v635
    %v698 = vpack.c.b16 %v638, %v636
    %v699 = vpack.c.b16 %v641, %v639
    %v700 = vpack.c.b16 %v642, %v640
    %v701 = vpack.c.b16 %v645, %v643
    %v702 = vpack.c.b16 %v646, %v644
    %v703 = vpack.c.b16 %v649, %v647
    %v704 = vpack.c.b16 %v650, %v648
    %v705 = vpack.c.b16 %v653, %v651
    %v706 = vpack.c.b16 %v654, %v652
    %v707 = vpack.c.b16 %v657, %v655
    %v708 = vpack.c.b16 %v658, %v656
    %v709 = vpack.c.b16 %v661, %v659
    %v710 = vpack.c.b16 %v662, %v660
    %v711 = vpack.c.b16 %v665, %v663
    %v712 = vpack.c.b16 %v666, %v664
    %v713 = vpack.c.b16 %v669, %v667
    %v714 = vpack.c.b16 %v670, %v668
    %v715 = vpack.c.b16 %v673, %v671
    %v716 = vpack.c.b16 %v674, %v672
    %v717 = vpack.c.b16 %v677, %v675
    %v718 = vpack.c.b16 %v678, %v676
    %v719 = vpack.c.b16 %v681, %v679
    %v720 = vpack.c.b16 %v682, %v680
    %v721 = vpack.c.b16 %v685, %v683
    %v722 = vpack.c.b16 %v686, %v684
    %v723 = vpack.c.b16 %v689, %v687
    %v724 = vpack.c.b16 %v690, %v688
    %v725 = vpack.c.b16 %v693, %v691
    %v726 = vpack.c.b16 %v694, %v692
    %759 = vmatprep.subr.bf16.mxu0 %v696
    %760 = vmatpush1.bf16.msra.mxu0 %v695
    %761 = vmatprep.subr.bf16.mxu0 %v698
    %762 = vmatpush1.bf16.msra.mxu0 %v697
    %763 = vmatprep.subr.bf16.mxu0 %v700
    %764 = vmatpush1.bf16.msra.mxu0 %v699
    %765 = vmatprep.subr.bf16.mxu0 %v702
    %766 = vmatpush1.bf16.msra.mxu0 %v701
    %767 = vmatprep.subr.bf16.mxu0 %v704
    %768 = vmatpush1.bf16.msra.mxu0 %v703
    %769 = vmatprep.subr.bf16.mxu0 %v706
    %770 = vmatpush1.bf16.msra.mxu0 %v705
    %771 = vmatprep.subr.bf16.mxu0 %v708
    %772 = vmatpush1.bf16.msra.mxu0 %v707
    %773 = vmatprep.subr.bf16.mxu0 %v710
    %774 = vmatpush1.bf16.msra.mxu0 %v709
    %775 = vmatprep.subr.bf16.mxu0 %v712
    %776 = vmatpush1.bf16.msra.mxu0 %v711
    %777 = vmatprep.subr.bf16.mxu0 %v714
    %778 = vmatpush1.bf16.msra.mxu0 %v713
    %779 = vmatprep.subr.bf16.mxu0 %v716
    %780 = vmatpush1.bf16.msra.mxu0 %v715
    %781 = vmatprep.subr.bf16.mxu0 %v718
    %782 = vmatpush1.bf16.msra.mxu0 %v717
    %783 = vmatprep.subr.bf16.mxu0 %v720
    %784 = vmatpush1.bf16.msra.mxu0 %v719
    %785 = vmatprep.subr.bf16.mxu0 %v722
    %786 = vmatpush1.bf16.msra.mxu0 %v721
    %787 = vmatprep.subr.bf16.mxu0 %v724
    %788 = vmatpush1.bf16.msra.mxu0 %v723
    %789 = vmatprep.subr.bf16.mxu0 %v726
    %790 = vmatpush1.bf16.msra.mxu0 %v725
    %791 = vmatprep.mubr.bf16.mxu0 %v554
    %792 = vmatmul.mubr.bf16.gmra.mrb[0].mxu0 %v553
    %v793 = vpop.f32.mrb[0].mxu0
    %v794 = vadd.f32 %v592, %v793
    %v795 = vpop.f32.mrb[0].mxu0
    %v796 = vadd.f32 %v596, %v795
    %v797 = vpop.f32.mrb[0].mxu0
    %v798 = vadd.f32 %v592, %v797
    %v799 = vpop.f32.mrb[0].mxu0
    %v800 = vadd.f32 %v596, %v799
    %801 = vdwg.mxu0
    %v802 = vpack.c.bf16 %v798, %v794
    %v803 = vpack.c.bf16 %v800, %v796
    %v804 = vtanh.bf16.pop %v802
    %v805 = vtanh.bf16.pop %v803
    %v806 = vld [vmem:[#allocation7] sm:$0xf]
    %v807 = vld [vmem:[#allocation7 + $0x4] sm:$0xf]
    %v808 = vld [vmem:[#allocation7 + $0x8] sm:$0xf]
    %v809 = vld [vmem:[#allocation7 + $0xc] sm:$0xf]
    %v810 = vld [vmem:[#allocation7 + $0x10] sm:$0xf]
    %v811 = vld [vmem:[#allocation7 + $0x14] sm:$0xf]
    %v812 = vld [vmem:[#allocation7 + $0x18] sm:$0xf]
    %v813 = vld [vmem:[#allocation7 + $0x1c] sm:$0xf]
    %v814 = vld [vmem:[#allocation7 + $0x20] sm:$0xf]
    %v815 = vld [vmem:[#allocation7 + $0x24] sm:$0xf]
    %v816 = vld [vmem:[#allocation7 + $0x28] sm:$0xf]
    %v817 = vld [vmem:[#allocation7 + $0x2c] sm:$0xf]
    %v818 = vld [vmem:[#allocation7 + $0x30] sm:$0xf]
    %v819 = vld [vmem:[#allocation7 + $0x34] sm:$0xf]
    %v820 = vld [vmem:[#allocation7 + $0x38] sm:$0xf]
    %v821 = vld [vmem:[#allocation7 + $0x3c] sm:$0xf]
    %v822 = vld [vmem:[#allocation7 + $0x40] sm:$0xf]
    %v823 = vld [vmem:[#allocation7 + $0x44] sm:$0xf]
    %v824 = vld [vmem:[#allocation7 + $0x48] sm:$0xf]
    %v825 = vld [vmem:[#allocation7 + $0x4c] sm:$0xf]
    %v826 = vld [vmem:[#allocation7 + $0x50] sm:$0xf]
    %v827 = vld [vmem:[#allocation7 + $0x54] sm:$0xf]
    %v828 = vld [vmem:[#allocation7 + $0x58] sm:$0xf]
    %v829 = vld [vmem:[#allocation7 + $0x5c] sm:$0xf]
    %v830 = vld [vmem:[#allocation7 + $0x60] sm:$0xf]
    %v831 = vld [vmem:[#allocation7 + $0x64] sm:$0xf]
    %v832 = vld [vmem:[#allocation7 + $0x68] sm:$0xf]
    %v833 = vld [vmem:[#allocation7 + $0x6c] sm:$0xf]
    %v834 = vld [vmem:[#allocation7 + $0x70] sm:$0xf]
    %v835 = vld [vmem:[#allocation7 + $0x74] sm:$0xf]
    %v836 = vld [vmem:[#allocation7 + $0x78] sm:$0xf]
    %v837 = vld [vmem:[#allocation7 + $0x7c] sm:$0xf]
    %v838 = vld [vmem:[%s10] sm:$0x1]
    %v840 = vlaneseq
    %v841 = vshrl.u32 %v840, 7
    %v842 = vsub.s32 0, %v841
    %v843 = vrot.slane %v838, %v842
    %v877 = vunpack.c.l.b16 %v806
    %v878 = vunpack.c.l.b16 %v807
    %v879 = vunpack.c.l.b16 %v808
    %v880 = vunpack.c.l.b16 %v809
    %v881 = vunpack.c.l.b16 %v810
    %v882 = vunpack.c.l.b16 %v811
    %v883 = vunpack.c.l.b16 %v812
    %v884 = vunpack.c.l.b16 %v813
    %v885 = vunpack.c.l.b16 %v814
    %v886 = vunpack.c.l.b16 %v815
    %v887 = vunpack.c.l.b16 %v816
    %v888 = vunpack.c.l.b16 %v817
    %v889 = vunpack.c.l.b16 %v818
    %v890 = vunpack.c.l.b16 %v819
    %v891 = vunpack.c.l.b16 %v820
    %v892 = vunpack.c.l.b16 %v821
    %v893 = vunpack.c.l.b16 %v822
    %v894 = vunpack.c.l.b16 %v823
    %v895 = vunpack.c.l.b16 %v824
    %v896 = vunpack.c.l.b16 %v825
    %v897 = vunpack.c.l.b16 %v826
    %v898 = vunpack.c.l.b16 %v827
    %v899 = vunpack.c.l.b16 %v828
    %v900 = vunpack.c.l.b16 %v829
    %v901 = vunpack.c.l.b16 %v830
    %v902 = vunpack.c.l.b16 %v831
    %v903 = vunpack.c.l.b16 %v832
    %v904 = vunpack.c.l.b16 %v833
    %v905 = vunpack.c.l.b16 %v834
    %v906 = vunpack.c.l.b16 %v835
    %v907 = vunpack.c.l.b16 %v836
    %v908 = vunpack.c.l.b16 %v837
    %v909 = vpack.c.b16 %v878, %v877
    %v910 = vpack.c.b16 %v880, %v879
    %v911 = vpack.c.b16 %v882, %v881
    %v912 = vpack.c.b16 %v884, %v883
    %v913 = vpack.c.b16 %v886, %v885
    %v914 = vpack.c.b16 %v888, %v887
    %v915 = vpack.c.b16 %v890, %v889
    %v916 = vpack.c.b16 %v892, %v891
    %v917 = vpack.c.b16 %v894, %v893
    %v918 = vpack.c.b16 %v896, %v895
    %v919 = vpack.c.b16 %v898, %v897
    %v920 = vpack.c.b16 %v900, %v899
    %v921 = vpack.c.b16 %v902, %v901
    %v922 = vpack.c.b16 %v904, %v903
    %v923 = vpack.c.b16 %v906, %v905
    %v924 = vpack.c.b16 %v908, %v907
    %941 = vmatprep.subr.bf16.mxu0 0
    %942 = vmatpush1.bf16.msra.mxu0 %v909
    %943 = vmatprep.subr.bf16.mxu0 0
    %944 = vmatpush1.bf16.msra.mxu0 %v910
    %945 = vmatprep.subr.bf16.mxu0 0
    %946 = vmatpush1.bf16.msra.mxu0 %v911
    %947 = vmatprep.subr.bf16.mxu0 0
    %948 = vmatpush1.bf16.msra.mxu0 %v912
    %949 = vmatprep.subr.bf16.mxu0 0
    %950 = vmatpush1.bf16.msra.mxu0 %v913
    %951 = vmatprep.subr.bf16.mxu0 0
    %952 = vmatpush1.bf16.msra.mxu0 %v914
    %953 = vmatprep.subr.bf16.mxu0 0
    %954 = vmatpush1.bf16.msra.mxu0 %v915
    %955 = vmatprep.subr.bf16.mxu0 0
    %956 = vmatpush1.bf16.msra.mxu0 %v916
    %957 = vmatprep.subr.bf16.mxu0 0
    %958 = vmatpush1.bf16.msra.mxu0 %v917
    %959 = vmatprep.subr.bf16.mxu0 0
    %960 = vmatpush1.bf16.msra.mxu0 %v918
    %961 = vmatprep.subr.bf16.mxu0 0
    %962 = vmatpush1.bf16.msra.mxu0 %v919
    %963 = vmatprep.subr.bf16.mxu0 0
    %964 = vmatpush1.bf16.msra.mxu0 %v920
    %965 = vmatprep.subr.bf16.mxu0 0
    %966 = vmatpush1.bf16.msra.mxu0 %v921
    %967 = vmatprep.subr.bf16.mxu0 0
    %968 = vmatpush1.bf16.msra.mxu0 %v922
    %969 = vmatprep.subr.bf16.mxu0 0
    %970 = vmatpush1.bf16.msra.mxu0 %v923
    %971 = vmatprep.subr.bf16.mxu0 0
    %972 = vmatpush1.bf16.msra.mxu0 %v924
    %973 = vmatprep.mubr.bf16.mxu0 %v805
    %974 = vmatmul.mubr.bf16.gmra.mrb[0].mxu0 %v804
    %v975 = vpop.f32.mrb[0].mxu0
    %v976 = vadd.f32 %v843, %v975
    %v977 = vpop.f32.mrb[0].mxu0
    %v978 = vpop.f32.mrb[0].mxu0
    %v979 = vadd.f32 %v843, %v978
    %v980 = vpop.f32.mrb[0].mxu0
    %981 = vdwg.mxu0
    %v982 = vpack.c.bf16 %v979, %v976
    %v984 = vunpack.c.l.b16 %v982
    %v985 = vunpack.c.h.b16 %v982
    %v986 = vpack.c.b16 %v984, %v984
    %v987 = vpack.c.b16 %v985, %v985
    %990 = vst [vmem:[%s11] sm:$0xf] %v986
    %991 = vst [vmem:[%s11 + $0x4] sm:$0xf] %v987
    // Predicated region
    $region62: #{_forward_impl.1} parent=1 // pred_check
      _
    $region63: #{_forward_impl.1} parent=1 // pred_check_branch
      %993 = sbr.rel (0) target = $region65
    $region64: #{_forward_impl.1} parent=1 // pred_region
      _
    $region65: #{_forward_impl.1} parent=1 // pred_fallthru
      _
    // Predicated region
    $region66: #{_forward_impl.1} parent=1 // pred_check
      _
    $region67: #{_forward_impl.1} parent=1 // pred_check_branch
      %995 = sbr.rel (0) target = $region69
    $region68: #{_forward_impl.1} parent=1 // pred_region
      _
    $region69: #{_forward_impl.1} parent=1 // pred_fallthru
      _
    %996 = vsyncpa [#allocation3], 1
    %997 = vsyncpa [#allocation5], 1
    %998 = vsyncpa [#allocation8], 1

</llo_original>
